<compile_context>
chip_gen: v7x
topology: tpu7x:2x2x1
jax: 0.10.0
libtpu: 0.0.40
codegen_flags: <defaults>
</compile_context>

<pallas_src>
import functools

import jax
import jax.numpy as jnp
from jax import lax
from jax.experimental import pallas as pl
from jax.experimental.pallas import tpu as pltpu

_EPS = 1e-12  # F.normalize(p=2) eps


def _loss_kernel(zi_ref, zjt_ref, zjr_ref, zjp_ref, out_ref, *,
                 temperature, n_valid, n_pad):
    # ---- normalize this z_i row tile; fold 1/temperature into the scale ------
    zi = zi_ref[...].astype(jnp.float32)                        # (TM, Dp)
    inv_i = lax.rsqrt(jnp.maximum(jnp.sum(zi * zi, axis=1, keepdims=True),
                                  _EPS * _EPS)) * (1.0 / temperature)
    zi_s = (zi * inv_i).astype(jnp.bfloat16)                    # (TM, Dp) bf16

    # sim tile = (z_i_n / T) @ z_j_n^T as a standard (TM,K)@(K,N) MXU contraction
    # (zjt_ref already holds the normalized, transposed bf16 z_j).
    sim = jnp.dot(zi_s, zjt_ref[...],
                  preferred_element_type=jnp.float32)           # (TM, Np) f32

    # positive / correlated-pair logits: contiguous row-dots (VPU, O(TM*D)).
    zi_f = zi_s.astype(jnp.float32)
    pos = jnp.sum(zi_f * zjr_ref[...].astype(jnp.float32),
                  axis=1, keepdims=True)                        # sim[r, r]
    sim_pair = jnp.sum(zi_f * zjp_ref[...].astype(jnp.float32),
                       axis=1, keepdims=True)                   # sim[r, (r+B) % N]

    # logsumexp over all columns of the raw tile, then analytically remove the
    # correlated-pair column and the zero-similarity padded columns — no
    # (TM, Np) iota / compare / select passes.
    m = jnp.max(sim, axis=1, keepdims=True)                     # (TM, 1) f32
    p = jnp.exp((sim - m).astype(jnp.bfloat16))                 # bf16 EUP path
    s = jnp.sum(p.astype(jnp.float32), axis=1, keepdims=True)   # f32 accumulate
    s = s - jnp.exp((sim_pair - m).astype(jnp.bfloat16)).astype(jnp.float32)
    n_pad_cols = n_pad - n_valid
    if n_pad_cols:
        # padded z_j rows normalize to exactly zero -> their sim column is 0.
        s = s - n_pad_cols * jnp.exp((-m).astype(jnp.bfloat16)).astype(jnp.float32)
    lse = m + jnp.log(s)

    out_ref[...] = lse - pos                                    # per-row contribution


def _round_up(x, m):
    return ((x + m - 1) // m) * m


def distill_nt_xent(z_i, z_j, temperature, *, block_rows=256):
    """z_i, z_j: (N, D) arrays (already 'gathered'); returns scalar f32 loss."""
    N, D = z_i.shape
    assert N % 2 == 0 and z_j.shape == (N, D)
    batch = N // 2

    # Row tile: >= 16 for bf16 sublane packing, ideally the 128/256 MXU width.
    tm = max(16, min(_round_up(block_rows, 16), _round_up(N, 16)))
    n_pad = _round_up(N, tm)
    d_pad = _round_up(D, 128)
    n_blocks = n_pad // tm

    zi = z_i.astype(jnp.float32)
    zj = z_j.astype(jnp.float32)

    # One-time O(N*D) prep in the wrapper (XLA): normalize z_j, build the
    # "pair rows" z_j_n[(r + batch) % N], zero-pad, bf16-cast, pre-transpose.
    zj_n = zj / jnp.maximum(jnp.linalg.norm(zj, axis=1, keepdims=True), _EPS)
    zj_pair = jnp.roll(zj_n, -batch, axis=0)

    def _pad(x):
        return jnp.pad(x, ((0, n_pad - x.shape[0]), (0, d_pad - x.shape[1])))

    zi_p = _pad(zi)                                    # (Np, Dp) f32 (normalized in-kernel)
    zj_rows = _pad(zj_n).astype(jnp.bfloat16)          # (Np, Dp) bf16 (positive row-dot)
    zj_pair_rows = _pad(zj_pair).astype(jnp.bfloat16)  # (Np, Dp) bf16 (pair row-dot)
    zj_t = zj_rows.T                                   # (Dp, Np) bf16 (MXU RHS, resident)

    # Explicit scoped-VMEM budget: resident z_j^T (double-buffered by the pipeline),
    # the pipelined row tiles, and ~5 (TM, Np) f32-equivalent sim temporaries,
    # with 2x headroom; capped at the v7x physical 64 MiB.
    est = (2 * d_pad * n_pad * 2
           + 2 * tm * d_pad * (4 + 2 + 2) + 2 * tm * 4
           + 5 * tm * n_pad * 4)
    vmem_limit = min(max(2 * est + (8 << 20), 32 << 20), 64 << 20)

    kernel = functools.partial(_loss_kernel, temperature=float(temperature),
                               n_valid=N, n_pad=n_pad)

    contrib = pl.pallas_call(
        kernel,
        out_shape=jax.ShapeDtypeStruct((n_pad, 1), jnp.float32),
        grid_spec=pltpu.PrefetchScalarGridSpec(
            num_scalar_prefetch=0,
            grid=(n_blocks,),
            in_specs=[
                pl.BlockSpec((tm, d_pad), lambda i: (i, 0)),     # z_i row tile (f32)
                pl.BlockSpec((d_pad, n_pad), lambda i: (0, 0)),  # z_j_n^T, fetched once
                pl.BlockSpec((tm, d_pad), lambda i: (i, 0)),     # z_j_n rows (positives)
                pl.BlockSpec((tm, d_pad), lambda i: (i, 0)),     # z_j_n pair rows
            ],
            out_specs=pl.BlockSpec((tm, 1), lambda i: (i, 0)),
        ),
        compiler_params=pltpu.CompilerParams(
            dimension_semantics=("parallel",),   # independent row blocks (v7x: 2 TCs)
            vmem_limit_bytes=vmem_limit),
    )(zi_p, zj_t, zj_rows, zj_pair_rows)

    return jnp.sum(contrib[:N, 0]) * (1.0 / N)


def _reference_loss(z_i, z_j, temperature):
    """Pure-JAX reference mirroring the PyTorch forward."""
    eps = 1e-12
    zi = z_i / jnp.maximum(jnp.linalg.norm(z_i, axis=1, keepdims=True), eps)
    zj = z_j / jnp.maximum(jnp.linalg.norm(z_j, axis=1, keepdims=True), eps)
    N = zi.shape[0]
    B = N // 2
    sim = (zi @ zj.T) / temperature
    pos = jnp.diag(sim)
    idx = jnp.arange(N)
    pair = jnp.where(idx < B, idx + B, idx - B)
    masked = jnp.where(idx[None, :] == pair[:, None], -jnp.inf, sim)
    lse = jax.scipy.special.logsumexp(masked, axis=1)
    return jnp.sum(lse - pos) / N


if __name__ == "__main__":
    key = jax.random.PRNGKey(0)
    temperature = 0.5

    # --- case 1: module-sized shapes (batch_size=4, D=32), single row block ---
    k1, k2 = jax.random.split(key)
    batch_size, D = 4, 32
    N = 2 * batch_size
    z_i = jax.random.normal(k1, (N, D), dtype=jnp.float32)
    z_j = jax.random.normal(k2, (N, D), dtype=jnp.float32)

    loss = distill_nt_xent(z_i, z_j, temperature)
    jax.block_until_ready(loss)
    ref = _reference_loss(z_i, z_j, temperature)
    assert jnp.allclose(loss, ref, rtol=2e-2, atol=2e-2), (loss, ref)

    # --- case 2: multi-block grid with row and feature padding (N=24, D=40) ---
    k3, k4 = jax.random.split(k1)
    N2, D2 = 24, 40
    z_i2 = jax.random.normal(k3, (N2, D2), dtype=jnp.float32)
    z_j2 = jax.random.normal(k4, (N2, D2), dtype=jnp.float32)

    loss2 = distill_nt_xent(z_i2, z_j2, temperature, block_rows=16)
    jax.block_until_ready(loss2)
    ref2 = _reference_loss(z_i2, z_j2, temperature)
    assert jnp.allclose(loss2, ref2, rtol=2e-2, atol=2e-2), (loss2, ref2)

    print("KERNEL_OK")
</pallas_src>

<mosaic_0001>
module attributes {stable_mosaic.version = 11 : i64} {
  func.func @_loss_kernel(%arg0: i32, %arg1: memref<16x128xf32, #tpu.memory_space<vmem>>, %arg2: memref<128x16xbf16, #tpu.memory_space<vmem>>, %arg3: memref<16x128xbf16, #tpu.memory_space<vmem>>, %arg4: memref<16x128xbf16, #tpu.memory_space<vmem>>, %arg5: memref<16x1xf32, #tpu.memory_space<vmem>>) attributes {dimension_semantics = [#tpu.dimension_semantics<parallel>], iteration_bounds = array<i64: 1>, scalar_prefetch = 0 : i64, scratch_operands = 0 : i64, tpu.core_type = #tpu.core_type<tc>, window_params = [{transform_indices = @transform_0, window_bounds = array<i64: 16, 128>}, {pipeline_mode = #tpu.pipeline_mode<synchronous>, transform_indices = @transform_1, window_bounds = array<i64: 128, 16>}, {transform_indices = @transform_2, window_bounds = array<i64: 16, 128>}, {transform_indices = @transform_3, window_bounds = array<i64: 16, 128>}, {transform_indices = @transform_4, window_bounds = array<i64: 16, 1>}]} {
    %c0 = arith.constant 0 : index
    %c0_0 = arith.constant 0 : index
    %0 = vector.load %arg1[%c0, %c0_0] : memref<16x128xf32, #tpu.memory_space<vmem>>, vector<16x128xf32>
    %1 = arith.mulf %0, %0 : vector<16x128xf32>
    %cst = arith.constant dense<0.000000e+00> : vector<16xf32>
    %2 = vector.multi_reduction <add>, %1, %cst [1] : vector<16x128xf32> to vector<16xf32>
    %3 = vector.shape_cast %2 : vector<16xf32> to vector<16x1xf32>
    %cst_1 = arith.constant 1.000000e-24 : f32
    %4 = vector.broadcast %cst_1 : f32 to vector<16x1xf32>
    %5 = arith.maximumf %3, %4 : vector<16x1xf32>
    %6 = math.rsqrt %5 : vector<16x1xf32>
    %cst_2 = arith.constant 2.000000e+00 : f32
    %7 = vector.broadcast %cst_2 : f32 to vector<16x1xf32>
    %8 = arith.mulf %6, %7 : vector<16x1xf32>
    %9 = vector.broadcast %8 : vector<16x1xf32> to vector<16x128xf32>
    %10 = arith.mulf %0, %9 : vector<16x128xf32>
    %11 = arith.truncf %10 : vector<16x128xf32> to vector<16x128xbf16>
    %c0_3 = arith.constant 0 : index
    %c0_4 = arith.constant 0 : index
    %12 = vector.load %arg2[%c0_3, %c0_4] : memref<128x16xbf16, #tpu.memory_space<vmem>>, vector<128x16xbf16>
    %cst_5 = arith.constant dense<0.000000e+00> : vector<16x16xf32>
    %13 = tpu.matmul %11, %12, %cst_5 {dimension_numbers = #tpu.dot_dimension_numbers<[1], [0], [0], [1], [0, 0, 1, 1], [], []>} : vector<16x128xbf16>, vector<128x16xbf16>, vector<16x16xf32> -> vector<16x16xf32>
    %14 = arith.extf %11 : vector<16x128xbf16> to vector<16x128xf32>
    %c0_6 = arith.constant 0 : index
    %c0_7 = arith.constant 0 : index
    %15 = vector.load %arg3[%c0_6, %c0_7] : memref<16x128xbf16, #tpu.memory_space<vmem>>, vector<16x128xbf16>
    %16 = arith.extf %15 : vector<16x128xbf16> to vector<16x128xf32>
    %17 = arith.mulf %14, %16 : vector<16x128xf32>
    %cst_8 = arith.constant dense<0.000000e+00> : vector<16xf32>
    %18 = vector.multi_reduction <add>, %17, %cst_8 [1] : vector<16x128xf32> to vector<16xf32>
    %19 = vector.shape_cast %18 : vector<16xf32> to vector<16x1xf32>
    %c0_9 = arith.constant 0 : index
    %c0_10 = arith.constant 0 : index
    %20 = vector.load %arg4[%c0_9, %c0_10] : memref<16x128xbf16, #tpu.memory_space<vmem>>, vector<16x128xbf16>
    %21 = arith.extf %20 : vector<16x128xbf16> to vector<16x128xf32>
    %22 = arith.mulf %14, %21 : vector<16x128xf32>
    %cst_11 = arith.constant dense<0.000000e+00> : vector<16xf32>
    %23 = vector.multi_reduction <add>, %22, %cst_11 [1] : vector<16x128xf32> to vector<16xf32>
    %24 = vector.shape_cast %23 : vector<16xf32> to vector<16x1xf32>
    %cst_12 = arith.constant dense<0xFF800000> : vector<16xf32>
    %25 = vector.multi_reduction <maximumf>, %13, %cst_12 [1] : vector<16x16xf32> to vector<16xf32>
    %26 = vector.shape_cast %25 : vector<16xf32> to vector<16x1xf32>
    %27 = vector.broadcast %26 : vector<16x1xf32> to vector<16x16xf32>
    %28 = arith.subf %13, %27 : vector<16x16xf32>
    %29 = arith.truncf %28 : vector<16x16xf32> to vector<16x16xbf16>
    %30 = math.exp %29 : vector<16x16xbf16>
    %31 = arith.extf %30 : vector<16x16xbf16> to vector<16x16xf32>
    %cst_13 = arith.constant dense<0.000000e+00> : vector<16xf32>
    %32 = vector.multi_reduction <add>, %31, %cst_13 [1] : vector<16x16xf32> to vector<16xf32>
    %33 = vector.shape_cast %32 : vector<16xf32> to vector<16x1xf32>
    %34 = arith.subf %24, %26 : vector<16x1xf32>
    %35 = arith.truncf %34 : vector<16x1xf32> to vector<16x1xbf16>
    %36 = math.exp %35 : vector<16x1xbf16>
    %37 = arith.extf %36 : vector<16x1xbf16> to vector<16x1xf32>
    %38 = arith.subf %33, %37 : vector<16x1xf32>
    %cst_14 = arith.constant 0.000000e+00 : f32
    %39 = vector.broadcast %cst_14 : f32 to vector<16x1xf32>
    %40 = arith.subf %39, %26 : vector<16x1xf32>
    %41 = arith.truncf %40 : vector<16x1xf32> to vector<16x1xbf16>
    %42 = math.exp %41 : vector<16x1xbf16>
    %43 = arith.extf %42 : vector<16x1xbf16> to vector<16x1xf32>
    %cst_15 = arith.constant 8.000000e+00 : f32
    %44 = vector.broadcast %cst_15 : f32 to vector<16x1xf32>
    %45 = arith.mulf %44, %43 : vector<16x1xf32>
    %46 = arith.subf %38, %45 : vector<16x1xf32>
    %47 = math.log %46 : vector<16x1xf32>
    %48 = arith.addf %26, %47 : vector<16x1xf32>
    %49 = arith.subf %48, %19 : vector<16x1xf32>
    %c0_16 = arith.constant 0 : index
    %c0_17 = arith.constant 0 : index
    %50 = vector.load %arg5[%c0_16, %c0_17] : memref<16x1xf32, #tpu.memory_space<vmem>>, vector<16x1xf32>
    tpu.vector_store %arg5[%c0_16, %c0_17], %49 {strides = array<i32>} : memref<16x1xf32, #tpu.memory_space<vmem>>, vector<16x1xf32>,
    return
  }
  func.func @transform_0(%arg0: i32) -> (i32, i32) {
    %c0_i32 = arith.constant 0 : i32
    %c0_i32_0 = arith.constant 0 : i32
    return %arg0, %c0_i32 : i32, i32
  }
  func.func @transform_1(%arg0: i32) -> (i32, i32) {
    %c0_i32 = arith.constant 0 : i32
    %c0_i32_0 = arith.constant 0 : i32
    %c0_i32_1 = arith.constant 0 : i32
    return %c0_i32, %c0_i32_0 : i32, i32
  }
  func.func @transform_2(%arg0: i32) -> (i32, i32) {
    %c0_i32 = arith.constant 0 : i32
    %c0_i32_0 = arith.constant 0 : i32
    return %arg0, %c0_i32 : i32, i32
  }
  func.func @transform_3(%arg0: i32) -> (i32, i32) {
    %c0_i32 = arith.constant 0 : i32
    %c0_i32_0 = arith.constant 0 : i32
    return %arg0, %c0_i32 : i32, i32
  }
  func.func @transform_4(%arg0: i32) -> (i32, i32) {
    %c0_i32 = arith.constant 0 : i32
    %c0_i32_0 = arith.constant 0 : i32
    return %arg0, %c0_i32 : i32, i32
  }
}

</mosaic_0001>

<llo_original>
// kernel: tpu_custom_call.1
$region0: #{tpu_custom_call.1}
  #allocation0 [shape = 'u32[]', space=smem, size = 0x4, offset = 0x4, fixed_abs, tag = 'smem constant byte address 0x4 - core index']
  #allocation1 [shape = 'u32[144,128]{1,0:T(1,128)}', space=vmem, size = 0x12000, scoped, tag = 'internal scratch']
  %s0 = inlined_call_operand.vmem [shape: f32[16,128], index: 0, kind: input, shape index: {}]
  %s1 = inlined_call_operand.vmem [shape: bf16[128,16], index: 1, kind: input, shape index: {}]
  %s2 = inlined_call_operand.vmem [shape: bf16[16,128], index: 2, kind: input, shape index: {}]
  %s3 = inlined_call_operand.vmem [shape: bf16[16,128], index: 3, kind: input, shape index: {}]
  %s4 = inlined_call_operand.vmem [shape: f32[16,1], index: 4, kind: output, shape index: {}]
  %s5 = sld [smem:[#allocation0]]
  $region26: #{tpu_custom_call.1} parent=0
    _
  %s7 = ssub.s32 1, %s5
  %s8 = scalar_select 0, %s7, %s5
  // Predicated region
  $region2: #{tpu_custom_call.1} parent=0 // pred_check
    _
  $region3: #{tpu_custom_call.1} parent=0 // pred_check_branch
    %10 = sbr.rel (0) target = $region5
  $region4: #{tpu_custom_call.1} parent=0 // pred_region
    _
  $region5: #{tpu_custom_call.1} parent=0 // pred_fallthru
    _
  // Predicated region
  $region6: #{tpu_custom_call.1} parent=0 // pred_check
    _
  $region7: #{tpu_custom_call.1} parent=0 // pred_check_branch
    %12 = sbr.rel (0) target = $region9
  $region8: #{tpu_custom_call.1} parent=0 // pred_region
    _
  $region9: #{tpu_custom_call.1} parent=0 // pred_fallthru
    _
  // Predicated region
  $region10: #{tpu_custom_call.1} parent=0 // pred_check
    _
  $region11: #{tpu_custom_call.1} parent=0 // pred_check_branch
    %14 = sbr.rel (0) target = $region13
  $region12: #{tpu_custom_call.1} parent=0 // pred_region
    _
  $region13: #{tpu_custom_call.1} parent=0 // pred_fallthru
    _
  // Predicated region
  $region14: #{tpu_custom_call.1} parent=0 // pred_check
    _
  $region15: #{tpu_custom_call.1} parent=0 // pred_check_branch
    %16 = sbr.rel (0) target = $region17
  $region16: #{tpu_custom_call.1} parent=0 // pred_region
    _
  $region17: #{tpu_custom_call.1} parent=0 // pred_fallthru
    _
  %v18 = vld [vmem:[%s0] sm:$0xff]
  %v19 = vld [vmem:[%s0 + $0x8] sm:$0xff]
  %v20 = vmul.f32 %v18, %v18
  %v21 = vmul.f32 %v19, %v19
  %22 = vadd.xlane.f32.xlu0 %v20
  %v23 = vpop.xlane.xlu0 %22
  %24 = vadd.xlane.f32.xlu0 %v21
  %v25 = vpop.xlane.xlu0 %24
  %v26 = vmax.f32 %v23, 1e-24
  %v27 = vmax.f32 %v25, 1e-24
  %v28 = vrsqrt.pop %v26
  %v29 = vrsqrt.pop %v27
  %v30 = vmul.f32 %v28, 2.0
  %v31 = vmul.f32 %v29, 2.0
  %v32 = vmul.f32 %v18, %v30
  %v33 = vmul.f32 %v19, %v31
  %v34 = vpack.c.bf16 %v33, %v32
  %v35 = vld [vmem:[%s1] sm:$0xf]
  %v36 = vld [vmem:[%s1 + $0x4] sm:$0xf]
  %v37 = vld [vmem:[%s1 + $0x8] sm:$0xf]
  %v38 = vld [vmem:[%s1 + $0xc] sm:$0xf]
  %v39 = vld [vmem:[%s1 + $0x10] sm:$0xf]
  %v40 = vld [vmem:[%s1 + $0x14] sm:$0xf]
  %v41 = vld [vmem:[%s1 + $0x18] sm:$0xf]
  %v42 = vld [vmem:[%s1 + $0x1c] sm:$0xf]
  %v43 = vld [vmem:[%s1 + $0x20] sm:$0xf]
  %v44 = vld [vmem:[%s1 + $0x24] sm:$0xf]
  %v45 = vld [vmem:[%s1 + $0x28] sm:$0xf]
  %v46 = vld [vmem:[%s1 + $0x2c] sm:$0xf]
  %v47 = vld [vmem:[%s1 + $0x30] sm:$0xf]
  %v48 = vld [vmem:[%s1 + $0x34] sm:$0xf]
  %v49 = vld [vmem:[%s1 + $0x38] sm:$0xf]
  %v50 = vld [vmem:[%s1 + $0x3c] sm:$0xf]
  %v67 = vunpack.c.l.b16 %v35
  %v68 = vunpack.c.l.b16 %v36
  %v69 = vunpack.c.l.b16 %v37
  %v70 = vunpack.c.l.b16 %v38
  %v71 = vunpack.c.l.b16 %v39
  %v72 = vunpack.c.l.b16 %v40
  %v73 = vunpack.c.l.b16 %v41
  %v74 = vunpack.c.l.b16 %v42
  %v75 = vunpack.c.l.b16 %v43
  %v76 = vunpack.c.l.b16 %v44
  %v77 = vunpack.c.l.b16 %v45
  %v78 = vunpack.c.l.b16 %v46
  %v79 = vunpack.c.l.b16 %v47
  %v80 = vunpack.c.l.b16 %v48
  %v81 = vunpack.c.l.b16 %v49
  %v82 = vunpack.c.l.b16 %v50
  %v83 = vpack.c.b16 %v68, %v67
  %v84 = vpack.c.b16 %v70, %v69
  %v85 = vpack.c.b16 %v72, %v71
  %v86 = vpack.c.b16 %v74, %v73
  %v87 = vpack.c.b16 %v76, %v75
  %v88 = vpack.c.b16 %v78, %v77
  %v89 = vpack.c.b16 %v80, %v79
  %v90 = vpack.c.b16 %v82, %v81
  %99 = vmatprep.subr.bf16.mxu0 0
  %100 = vmatpush1.bf16.msra.mxu0 %v83
  %101 = vmatprep.subr.bf16.mxu0 0
  %102 = vmatpush1.bf16.msra.mxu0 %v84
  %103 = vmatprep.subr.bf16.mxu0 0
  %104 = vmatpush1.bf16.msra.mxu0 %v85
  %105 = vmatprep.subr.bf16.mxu0 0
  %106 = vmatpush1.bf16.msra.mxu0 %v86
  %107 = vmatprep.subr.bf16.mxu0 0
  %108 = vmatpush1.bf16.msra.mxu0 %v87
  %109 = vmatprep.subr.bf16.mxu0 0
  %110 = vmatpush1.bf16.msra.mxu0 %v88
  %111 = vmatprep.subr.bf16.mxu0 0
  %112 = vmatpush1.bf16.msra.mxu0 %v89
  %113 = vmatprep.subr.bf16.mxu0 0
  %114 = vmatpush1.bf16.msra.mxu0 %v90
  %115 = vmatprep.subr.bf16.mxu0 0
  %116 = vmatpush1.bf16.msra.mxu0 0
  %117 = vmatprep.subr.bf16.mxu0 0
  %118 = vmatpush1.bf16.msra.mxu0 0
  %119 = vmatprep.subr.bf16.mxu0 0
  %120 = vmatpush1.bf16.msra.mxu0 0
  %121 = vmatprep.subr.bf16.mxu0 0
  %122 = vmatpush1.bf16.msra.mxu0 0
  %123 = vmatprep.subr.bf16.mxu0 0
  %124 = vmatpush1.bf16.msra.mxu0 0
  %125 = vmatprep.subr.bf16.mxu0 0
  %126 = vmatpush1.bf16.msra.mxu0 0
  %127 = vmatprep.subr.bf16.mxu0 0
  %128 = vmatpush1.bf16.msra.mxu0 0
  %129 = vmatprep.subr.bf16.mxu0 0
  %130 = vmatpush1.bf16.msra.mxu0 0
  %131 = vmatprep.mubr.bf16.mxu0 0
  %132 = vmatmul.mubr.bf16.gmra.mrb[0].mxu0 %v34
  %v133 = vpop.f32.mrb[0].mxu0
  %v134 = vadd.f32 0.0, %v133
  %v135 = vpop.f32.mrb[0].mxu0
  %v136 = vpop.f32.mrb[0].mxu0
  %v137 = vadd.f32 0.0, %v136
  %v138 = vpop.f32.mrb[0].mxu0
  %139 = vdwg.mxu0
  %v140 = vunpack.c.l.bf16 %v34
  %v141 = vunpack.c.h.bf16 %v34
  %v142 = vld [vmem:[%s2] sm:$0xf]
  %v143 = vld [vmem:[%s2 + $0x4] sm:$0xf]
  %v144 = vunpack.c.l.bf16 %v142
  %v145 = vunpack.c.l.bf16 %v143
  %v146 = vmul.f32 %v140, %v144
  %v147 = vmul.f32 %v141, %v145
  %148 = vadd.xlane.f32.xlu0 %v146
  %v149 = vpop.xlane.xlu0 %148
  %150 = vadd.xlane.f32.xlu0 %v147
  %v151 = vpop.xlane.xlu0 %150
  %v152 = vld [vmem:[%s3] sm:$0xf]
  %v153 = vld [vmem:[%s3 + $0x4] sm:$0xf]
  %v154 = vunpack.c.l.bf16 %v152
  %v155 = vunpack.c.l.bf16 %v153
  %v156 = vmul.f32 %v140, %v154
  %v157 = vmul.f32 %v141, %v155
  %158 = vadd.xlane.f32.xlu0 %v156
  %v159 = vpop.xlane.xlu0 %158
  %160 = vadd.xlane.f32.xlu0 %v157
  %v161 = vpop.xlane.xlu0 %160
  %vm162 = vcmask 130048
  %v163 = vsel %vm162, %v134, -inf
  %164 = vmax.xlane.f32.xlu0 %v163
  %v165 = vpop.xlane.xlu0 %164
  %v166 = vsel %vm162, %v137, -inf
  %167 = vmax.xlane.f32.xlu0 %v166
  %v168 = vpop.xlane.xlu0 %167
  %v169 = vsub.f32 %v134, %v165
  %v170 = vsub.f32 %v137, %v168
  %v171 = vpack.c.bf16 %v170, %v169
  %v173 = vmul.bf16 %v171, 1069105081
  %v174 = vpow.bf16.pop %v173
  %v175 = vunpack.c.l.bf16 %v174
  %v176 = vunpack.c.h.bf16 %v174
  %v177 = vsel %vm162, %v175, 0.0
  %178 = vadd.xlane.f32.xlu0 %v177
  %v179 = vpop.xlane.xlu0 %178
  %v180 = vsel %vm162, %v176, 0.0
  %181 = vadd.xlane.f32.xlu0 %v180
  %v182 = vpop.xlane.xlu0 %181
  %v183 = vsub.f32 %v159, %v165
  %v184 = vsub.f32 %v161, %v168
  %v185 = vpack.c.bf16 %v184, %v183
  %v187 = vmul.bf16 %v185, 1069105081
  %v188 = vpow.bf16.pop %v187
  %v189 = vunpack.c.l.bf16 %v188
  %v190 = vunpack.c.h.bf16 %v188
  %v191 = vsub.f32 %v179, %v189
  %v192 = vsub.f32 %v182, %v190
  %v193 = vsub.f32 0.0, %v165
  %v194 = vsub.f32 0.0, %v168
  %v195 = vpack.c.bf16 %v194, %v193
  %v197 = vmul.bf16 %v195, 1069105081
  %v198 = vpow.bf16.pop %v197
  %v199 = vunpack.c.l.bf16 %v198
  %v200 = vunpack.c.h.bf16 %v198
  %v201 = vmul.f32 %v199, 8.0
  %v202 = vmul.f32 %v200, 8.0
  %v203 = vsub.f32 %v191, %v201
  %v204 = vsub.f32 %v192, %v202
  %v205 = vlog2.pop %v203
  %v206 = vmul.f32 %v205, 0.6931472
  %v207 = vlog2.pop %v204
  %v208 = vmul.f32 %v207, 0.6931472
  %v209 = vadd.f32 %v165, %v206
  %v210 = vadd.f32 %v168, %v208
  %v211 = vsub.f32 %v209, %v149
  %v212 = vsub.f32 %v210, %v151
  %vm213 = vcmask 7168
  %214 = vst.msk [vmem:[%s4] sm:$0xff] %vm213, %v211
  %215 = vst.msk [vmem:[%s4 + $0x8] sm:$0xff] %vm213, %v212
  // Predicated region
  $region18: #{tpu_custom_call.1} parent=0 // pred_check
    _
  $region19: #{tpu_custom_call.1} parent=0 // pred_check_branch
    %217 = sbr.rel (0) target = $region21
  $region20: #{tpu_custom_call.1} parent=0 // pred_region
    _
  $region21: #{tpu_custom_call.1} parent=0 // pred_fallthru
    _
  // Predicated region
  $region22: #{tpu_custom_call.1} parent=0 // pred_check
    _
  $region23: #{tpu_custom_call.1} parent=0 // pred_check_branch
    %219 = sbr.rel (0) target = $region25
  $region24: #{tpu_custom_call.1} parent=0 // pred_region
    _
  $region25: #{tpu_custom_call.1} parent=0 // pred_fallthru
    _

</llo_original>
